<compile_context>
chip_gen: v5e
topology: v5e:2x2
jax: 0.10.0
libtpu: 0.0.40
codegen_flags: <defaults>
</compile_context>

<pallas_src>
import functools

import jax
import jax.numpy as jnp
from jax import lax
from jax.experimental import pallas as pl
from jax.experimental.pallas import tpu as pltpu


def _lam_kernel(gamma_ref, x_ref, o_ref, *, n):
    x_in = x_ref[...]                                     # (rows, M)
    rows = x_in.shape[0]

    # energy = Xf @ Xf^T: one lane-dense MXU Gram matmul (contract the last
    # dims directly; no transposed copy is materialized).
    energy = lax.dot_general(
        x_in, x_in,
        dimension_numbers=(((1,), (1,)), ((), ())),
        preferred_element_type=jnp.float32)               # (rows, rows) f32

    # Rows / cols only attend within their own batch's N x N diagonal block.
    # Masked entries get a huge energy -> weight exactly 0 after the softmax,
    # so the block-diagonal matmul below cannot mix batch elements.
    if rows > n:
        r = lax.broadcasted_iota(jnp.int32, (rows, rows), 0) // n
        c = lax.broadcasted_iota(jnp.int32, (rows, rows), 1) // n
        energy = jnp.where(r == c, energy, jnp.float32(3e38))

    # softmax(rowmax(E) - E) == exp(rowmin(E) - E) / rowsum (exact identity;
    # exponents stay <= 0 and masked entries underflow to exactly 0).
    rmin = jnp.min(energy, axis=-1, keepdims=True)
    e = jnp.exp(rmin - energy)
    denom = jnp.sum(e, axis=-1, keepdims=True)
    attn = e * pl.reciprocal(denom, approx=True)          # (rows, rows) f32

    # out = block-diag(attn) @ Xf : a single MXU matmul with K = rows.
    out = jnp.dot(attn.astype(x_in.dtype), x_in,
                  preferred_element_type=jnp.float32)     # (rows, M) f32

    # gamma * out + x, without materializing an f32 copy of x.
    o_ref[...] = (gamma_ref[0] * out).astype(o_ref.dtype) + x_in


def _tpu_params():
    """Returns (per-core VMEM bytes, TensorCores sharing a 'parallel' axis)."""
    vmem = 64 * 1024 * 1024                    # conservative default (v7x core)
    try:
        vmem = int(pltpu.get_tpu_info().vmem_capacity_bytes)
    except Exception:                          # non-TPU / interpret fallback
        pass
    # v7x pairs two TensorCores per chip (64 MiB VMEM each); v5e/v6e have a
    # single 128 MiB core.  Infer the core count from the per-core VMEM size.
    cores = 2 if vmem <= 64 * 1024 * 1024 else 1
    return vmem, cores


def _pick_tb(B, N, M, itemsize, vmem_budget_bytes, cores):
    """Batch elements per grid step."""

    def vmem_cost(tb):
        rows = tb * N
        # Double-buffered input + output tiles, the f32 `out` intermediate,
        # and ~4 (rows, rows) f32 temporaries (energy / exp / attention / mask).
        return rows * M * (4 * itemsize + 4) + 4 * rows * rows * 4

    # One MXU tile worth of rows (256) keeps the Gram matmul fully utilized
    # while its O(rows^2) off-block waste stays well below the HBM time; for
    # tiny M allow 512 rows so each DMA step is still a decent size.
    target_rows = 256 if M * itemsize >= 2048 else 512
    tb = min(max(1, target_rows // N), B)
    while tb > 1 and vmem_cost(tb) > vmem_budget_bytes:
        tb -= 1

    # Sublane rule on the block's second-minor dim (8 f32 / 16 bf16 / 32 int8);
    # a full-extent block (tb == B) is always exempt.
    sublane = 8 * (4 // max(1, itemsize))

    def ok(t, want_even_split):
        if B % t:
            return False
        if t != B and (t * N) % sublane:
            return False
        if want_even_split and (B // t) % cores:
            return False
        return True

    if cores > 1 and B >= cores:
        # Prefer a step count that splits evenly across the TensorCores.
        for t in range(tb, 0, -1):
            if ok(t, True):
                return t
    for t in range(tb, 0, -1):
        if ok(t, False):
            return t
    return B                                   # full batch: always legal


@jax.jit
def lam_module(x, gamma):
    """x: (B, N, C, H, W); gamma: (1,) float32.  Returns (B, N*C, H, W)."""
    B, N, C, H, W = x.shape
    M = C * H * W
    gamma = jnp.reshape(jnp.asarray(gamma, jnp.float32), (1,))

    x2 = x.reshape(B * N, M)
    # Only pad when the feature dim is smaller than one 128-lane vreg; for
    # M >= 128 the block uses the full (exempt) last dim and needs no pad /
    # slice HBM round trip.  Zero padding is exact for the Gram matmul.
    Mp = M
    if M < 128:
        Mp = 128
        x2 = jnp.pad(x2, ((0, 0), (0, Mp - M)))

    vmem_cap, cores = _tpu_params()
    tb = _pick_tb(B, N, Mp, x.dtype.itemsize, int(0.55 * vmem_cap), cores)
    rows = tb * N
    grid_b = B // tb

    out2 = pl.pallas_call(
        functools.partial(_lam_kernel, n=N),
        out_shape=jax.ShapeDtypeStruct((B * N, Mp), x.dtype),
        grid_spec=pltpu.PrefetchScalarGridSpec(
            num_scalar_prefetch=0,
            grid=(grid_b,),
            in_specs=[
                pl.BlockSpec(memory_space=pltpu.MemorySpace.SMEM),   # gamma
                pl.BlockSpec((rows, Mp), lambda i: (i, 0)),          # x (2-D)
            ],
            out_specs=pl.BlockSpec((rows, Mp), lambda i: (i, 0)),
        ),
        compiler_params=pltpu.CompilerParams(
            dimension_semantics=("parallel",),
            vmem_limit_bytes=int(0.75 * vmem_cap),
        ),
    )(gamma, x2)

    if Mp != M:
        out2 = out2[:, :M]
    return out2.reshape(B, N * C, H, W)


def lam_module_ref(x, gamma):
    """Pure-JAX reference mirroring the PyTorch forward."""
    B, N, C, H, W = x.shape
    q = x.reshape(B, N, -1)
    energy = jnp.einsum("bnm,bkm->bnk", q, q)
    energy_new = jnp.max(energy, axis=-1, keepdims=True) - energy
    attention = jax.nn.softmax(energy_new, axis=-1)
    out = jnp.einsum("bnk,bkm->bnm", attention, q)
    out = gamma[0] * out + q
    return out.reshape(B, N * C, H, W)


if __name__ == "__main__":
    # Small shapes consistent with the module: B x N x C x H x W.
    B, N, C, H, W = 2, 8, 4, 16, 16

    key = jax.random.PRNGKey(0)
    x = jax.random.normal(key, (B, N, C, H, W), dtype=jnp.float32)

    # Module __init__ uses torch.zeros(1); use a nonzero gamma so the
    # attention path contributes, plus a gamma=0 run checked exactly below.
    gamma = jnp.array([0.5], dtype=jnp.float32)

    out = jax.block_until_ready(lam_module(x, gamma))
    ref = lam_module_ref(x, gamma)
    assert out.shape == (B, N * C, H, W)

    # gamma == 0: output must equal the (reshaped) input with no tolerance --
    # this checks the blocking / masking / residual / reshape plumbing exactly.
    out0 = jax.block_until_ready(lam_module(x, jnp.zeros((1,), jnp.float32)))
    assert jnp.array_equal(out0, x.reshape(B, N * C, H, W))

    # Attention path: both the kernel and the reference run their matmuls at
    # the TPU's DEFAULT (bf16-operand) precision; the residual mismatch is
    # dominated by differing accumulation order / operand-rounding boundaries
    # through the softmax (few e-3 worst case at |x| ~ 3 sigma), not by the
    # ~2e-4 approximate-reciprocal error, hence 1e-2 rather than f32-exact.
    assert jnp.allclose(out, ref, atol=1e-2, rtol=1e-2), float(
        jnp.max(jnp.abs(out - ref)))

    print("KERNEL_OK")
</pallas_src>

<mosaic_0001>
module attributes {stable_mosaic.version = 11 : i64} {
  func.func @_lam_kernel(%arg0: i32, %arg1: memref<1xf32, #tpu.memory_space<smem>>, %arg2: memref<8x1024xf32, #tpu.memory_space<vmem>>, %arg3: memref<8x1024xf32, #tpu.memory_space<vmem>>) attributes {dimension_semantics = [#tpu.dimension_semantics<parallel>], iteration_bounds = array<i64: 2>, scalar_prefetch = 0 : i64, scratch_operands = 0 : i64, tpu.core_type = #tpu.core_type<tc>, window_params = [{transform_indices = @transform_0, window_bounds = array<i64: 1>}, {transform_indices = @transform_1, window_bounds = array<i64: 8, 1024>}, {transform_indices = @transform_2, window_bounds = array<i64: 8, 1024>}]} {
    %c0 = arith.constant 0 : index
    %c0_0 = arith.constant 0 : index
    %0 = vector.load %arg2[%c0, %c0_0] : memref<8x1024xf32, #tpu.memory_space<vmem>>, vector<8x1024xf32>
    %cst = arith.constant dense<0.000000e+00> : vector<8x8xf32>
    %1 = tpu.matmul %0, %0, %cst {dimension_numbers = #tpu.dot_dimension_numbers<[1], [1], [0], [0], [0, 0, 1, 0], [], []>} : vector<8x1024xf32>, vector<8x1024xf32>, vector<8x8xf32> -> vector<8x8xf32>
    %cst_1 = arith.constant dense<0x7F800000> : vector<8xf32>
    %2 = vector.multi_reduction <minimumf>, %1, %cst_1 [1] : vector<8x8xf32> to vector<8xf32>
    %3 = vector.shape_cast %2 : vector<8xf32> to vector<8x1xf32>
    %4 = vector.broadcast %3 : vector<8x1xf32> to vector<8x8xf32>
    %5 = arith.subf %4, %1 : vector<8x8xf32>
    %6 = math.exp %5 : vector<8x8xf32>
    %cst_2 = arith.constant dense<0.000000e+00> : vector<8xf32>
    %7 = vector.multi_reduction <add>, %6, %cst_2 [1] : vector<8x8xf32> to vector<8xf32>
    %8 = vector.shape_cast %7 : vector<8xf32> to vector<8x1xf32>
    %9 = tpu.reciprocal %8 {approx = true} : vector<8x1xf32> -> vector<8x1xf32>
    %10 = vector.broadcast %9 : vector<8x1xf32> to vector<8x8xf32>
    %11 = arith.mulf %6, %10 : vector<8x8xf32>
    %cst_3 = arith.constant dense<0.000000e+00> : vector<8x1024xf32>
    %12 = tpu.matmul %11, %0, %cst_3 {dimension_numbers = #tpu.dot_dimension_numbers<[1], [0], [0], [1], [0, 0, 1, 1], [], []>} : vector<8x8xf32>, vector<8x1024xf32>, vector<8x1024xf32> -> vector<8x1024xf32>
    %c0_4 = arith.constant 0 : index
    %13 = memref.load %arg1[%c0_4] : memref<1xf32, #tpu.memory_space<smem>>
    %14 = vector.broadcast %13 : f32 to vector<8x1024xf32>
    %15 = arith.mulf %14, %12 : vector<8x1024xf32>
    %16 = arith.addf %15, %0 : vector<8x1024xf32>
    %c0_5 = arith.constant 0 : index
    %c0_6 = arith.constant 0 : index
    %17 = vector.load %arg3[%c0_5, %c0_6] : memref<8x1024xf32, #tpu.memory_space<vmem>>, vector<8x1024xf32>
    tpu.vector_store %arg3[%c0_5, %c0_6], %16 {strides = array<i32>} : memref<8x1024xf32, #tpu.memory_space<vmem>>, vector<8x1024xf32>,
    return
  }
  func.func @transform_0(%arg0: i32) -> i32 {
    %c0_i32 = arith.constant 0 : i32
    %c0_i32_0 = arith.constant 0 : i32
    return %c0_i32 : i32
  }
  func.func @transform_1(%arg0: i32) -> (i32, i32) {
    %c0_i32 = arith.constant 0 : i32
    %c0_i32_0 = arith.constant 0 : i32
    return %arg0, %c0_i32 : i32, i32
  }
  func.func @transform_2(%arg0: i32) -> (i32, i32) {
    %c0_i32 = arith.constant 0 : i32
    %c0_i32_0 = arith.constant 0 : i32
    return %arg0, %c0_i32 : i32, i32
  }
}

</mosaic_0001>

<llo_original>
// kernel: lam_module.1
$region0: #{lam_module.1}
  #allocation0 [shape = 'u32[]', space=smem, size = 0x4, offset = 0x4, fixed_abs, tag = 'smem constant byte address 0x4 - core index']
  #allocation1 [shape = 'u32[72,128]{1,0:T(1,128)}', space=vmem, size = 0x9000, scoped, tag = 'internal scratch']
  #allocation2 [shape = 'f32[1]{0:T(128)S(6)}', space=smem, size = 0x200, scoped, tag = 'scoped memory for lam_module.1']
  %s0 = inlined_call_operand.<no memory space> [shape: f32[1], index: 0, kind: input, shape index: {}]
  %s1 = inlined_call_operand.vmem [shape: f32[16,1024], index: 1, kind: input, shape index: {}]
  %s2 = inlined_call_operand.vmem [shape: f32[16,1024], index: 2, kind: output, shape index: {}]
  %s3 = sld [smem:[#allocation0]]
  $region41: #{lam_module.1} parent=0
    _
  %s5 = ssub.s32 1, %s3
  %s6 = scalar_select 0, %s5, %s3
  %7 = sst [smem:[#allocation2]] %s0
  loop: start=0, step=1, limit=4
  $region2: #{lam_module.1} parent=0 // loop_pre_header
    _
  $region3: #{lam_module.1} parent=0 // loop_header
    %s9 = sphi 0, %s13
    %p10 = scmp.ge.s32.totalorder %s9, 4
    %s17 = sphi 0, %s17
    %s19 = sphi 0, %s17
    %s20 = sphi 0, %s19
    %s34 = sphi 0, %s20
    %s40 = sphi 0, %s42
    %s43 = sphi 0, %s40
    %s44 = sphi 0, %s43
    %s60 = sphi 0, %s44
    %s66 = sphi 0, %s68
    %s69 = sphi 0, %s66
    %s70 = sphi 0, %s69
    %s86 = sphi 0, %s70
  $region4: #{lam_module.1} parent=0 // loop_header_branch
    %12 = sbr.rel (%p10) target = $region8
  $region5: #{lam_module.1} parent=0 // loop_body
    %s14 = ssub.s32 %s9, 1
    %s15 = ssub.s32 %s9, 2
    %s16 = sadd.s32 %s9, 1
    %s18 = sadd.s32 %s17, 1
    %p21 = scmp.eq.s32.totalorder %s9, 1
    %p22 = scmp.ne.s32.totalorder %s17, %s19
    %p23 = scmp.eq.s32.totalorder %s9, 0
    %p24 = por %p22, %p23
    %p25 = scmp.ne.s32.totalorder %s17, %s19
    %p26 = scmp.eq.s32.totalorder %s14, 1
    %p27 = por %p25, %p26
    %p28 = scmp.ne.s32.totalorder %s19, %s20
    %p29 = scmp.eq.s32.totalorder %s14, 0
    %p30 = por %p28, %p29
    %p31 = scmp.ne.s32.totalorder %s19, %s20
    %p32 = scmp.eq.s32.totalorder %s15, 1
    %p33 = por %p31, %p32
    %p35 = scmp.ne.s32.totalorder %s20, %s34
    %p36 = scmp.eq.s32.totalorder %s15, 0
    %p37 = por %p35, %p36
    %s38 = ssub.s32 %s9, %s16
    %p39 = scmp.eq.s32.totalorder %s38, 0
    %s41 = sadd.s32 %s40, 1
    %s42 = scalar_select %p39, %s40, %s41
    %p45 = pneg %p39
    %p46 = scmp.eq.s32.totalorder %s9, 1
    %p47 = por %p45, %p46
    %p48 = scmp.ne.s32.totalorder %s40, %s43
    %p49 = scmp.eq.s32.totalorder %s9, 0
    %p50 = por %p48, %p49
    %p51 = scmp.ne.s32.totalorder %s40, %s43
    %p52 = scmp.eq.s32.totalorder %s14, 1
    %p53 = por %p51, %p52
    %p54 = scmp.ne.s32.totalorder %s43, %s44
    %p55 = scmp.eq.s32.totalorder %s14, 0
    %p56 = por %p54, %p55
    %p57 = scmp.ne.s32.totalorder %s43, %s44
    %p58 = scmp.eq.s32.totalorder %s15, 1
    %p59 = por %p57, %p58
    %p61 = scmp.ne.s32.totalorder %s44, %s60
    %p62 = scmp.eq.s32.totalorder %s15, 0
    %p63 = por %p61, %p62
    %s64 = ssub.s32 %s9, %s16
    %p65 = scmp.eq.s32.totalorder %s64, 0
    %s67 = sadd.s32 %s66, 1
    %s68 = scalar_select %p65, %s66, %s67
    %p71 = pneg %p65
    %p72 = scmp.eq.s32.totalorder %s9, 1
    %p73 = por %p71, %p72
    %p74 = scmp.ne.s32.totalorder %s66, %s69
    %p75 = scmp.eq.s32.totalorder %s9, 0
    %p76 = por %p74, %p75
    %p77 = scmp.ne.s32.totalorder %s66, %s69
    %p78 = scmp.eq.s32.totalorder %s14, 1
    %p79 = por %p77, %p78
    %p80 = scmp.ne.s32.totalorder %s69, %s70
    %p81 = scmp.eq.s32.totalorder %s14, 0
    %p82 = por %p80, %p81
    %p83 = scmp.ne.s32.totalorder %s69, %s70
    %p84 = scmp.eq.s32.totalorder %s15, 1
    %p85 = por %p83, %p84
    %p87 = scmp.ne.s32.totalorder %s70, %s86
    %p88 = scmp.eq.s32.totalorder %s15, 0
    %p89 = por %p87, %p88
    %p90 = scmp.le.s32.totalorder 1, %s9
    %p91 = scmp.lt.s32.totalorder %s9, 3
    %p92 = pnand %p90, %p91
    %p93 = pneg %p92
    // Predicated region
    $region9: #{lam_module.1} parent=5 // pred_check
      _
    $region10: #{lam_module.1} parent=5 // pred_check_branch
      %95 = sbr.rel (%p92) target = $region12
    $region11: #{lam_module.1} parent=5 // pred_region
      %s96 = ssub.s32 %s9, 1
      // Predicated region
      $region13: #{lam_module.1} parent=11 // pred_check
        %p97 = pneg %p30
      $region14: #{lam_module.1} parent=11 // pred_check_branch
        %99 = sbr.rel (%p97) target = $region16
      $region15: #{lam_module.1} parent=11 // pred_region
        _
      $region16: #{lam_module.1} parent=11 // pred_fallthru
        _
    $region12: #{lam_module.1} parent=5 // pred_fallthru
      _
    %p100 = scmp.lt.s32.totalorder %s9, 2
    // Predicated region
    $region17: #{lam_module.1} parent=5 // pred_check
      %p101 = pneg %p100
    $region18: #{lam_module.1} parent=5 // pred_check_branch
      %103 = sbr.rel (%p101) target = $region20
    $region19: #{lam_module.1} parent=5 // pred_region
      // Predicated region
      $region21: #{lam_module.1} parent=19 // pred_check
        %p104 = pneg %p50
      $region22: #{lam_module.1} parent=19 // pred_check_branch
        %106 = sbr.rel (%p104) target = $region24
      $region23: #{lam_module.1} parent=19 // pred_region
        %p107 = scmp.lt.s32.totalorder %s9, 1
        %s108 = scalar_select %p107, %s9, 1
        %s109 = smul.addr %s108, 8
        %s110 = smul.addr %s109, 8
        %s111 = scalar_lea.vmem %s1, %s110
      $region24: #{lam_module.1} parent=19 // pred_fallthru
        _
    $region20: #{lam_module.1} parent=5 // pred_fallthru
      _
    %p112 = scmp.le.s32.totalorder 1, %s9
    %p113 = scmp.lt.s32.totalorder %s9, 3
    %p114 = pnand %p112, %p113
    %p115 = pneg %p114
    // Predicated region
    $region25: #{lam_module.1} parent=5 // pred_check
      _
    $region26: #{lam_module.1} parent=5 // pred_check_branch
      %117 = sbr.rel (%p114) target = $region28
    $region27: #{lam_module.1} parent=5 // pred_region
      %s118 = ssub.s32 %s9, 1
      %p119 = pneg %p30
      %p120 = pneg %p27
      %p121 = scmp.lt.s32.totalorder %s14, 1
      %s122 = scalar_select %p121, %s14, 1
      %s123 = smul.addr %s122, 8
      %s124 = smul.addr %s123, 8
      %s125 = scalar_lea.vmem %s1, %s124
      %p126 = pneg %p56
      %p127 = pneg %p53
      %p128 = pneg %p82
      %p129 = pneg %p79
      %p130 = scmp.lt.s32.totalorder %s14, 1
      %s131 = scalar_select %p130, %s14, 1
      %s132 = smul.addr %s131, 8
      %s133 = smul.addr %s132, 8
      %s134 = scalar_lea.vmem %s2, %s133
      %p135 = scmp.lt.s32.totalorder %s14, 1
      %s136 = scalar_select %p135, %s14, 1
      %s137 = smul.addr %s136, 8
      %s138 = smul.addr %s137, 8
      %s139 = scalar_lea.vmem %s1, %s138
      %p140 = scmp.lt.s32.totalorder %s14, 1
      %s141 = scalar_select %p140, %s14, 1
      %s142 = smul.addr %s141, 8
      %s143 = smul.addr %s142, 8
      %s144 = scalar_lea.vmem %s2, %s143
      %v145 = vld [vmem:[%s139] sm:$0xff]
      %v146 = vld [vmem:[%s139 + $0x8] sm:$0xff]
      %v147 = vld [vmem:[%s139 + $0x10] sm:$0xff]
      %v148 = vld [vmem:[%s139 + $0x18] sm:$0xff]
      %v149 = vld [vmem:[%s139 + $0x20] sm:$0xff]
      %v150 = vld [vmem:[%s139 + $0x28] sm:$0xff]
      %v151 = vld [vmem:[%s139 + $0x30] sm:$0xff]
      %v152 = vld [vmem:[%s139 + $0x38] sm:$0xff]
      %153 = vmatpush.xpose.msra.mxu0 0.0
      %154 = vmatpush.xpose.msra.mxu0 0.0
      %155 = vmatpush.xpose.msra.mxu0 0.0
      %156 = vmatpush.xpose.msra.mxu0 0.0
      %157 = vmatpush.xpose.msra.mxu0 0.0
      %158 = vmatpush.xpose.msra.mxu0 0.0
      %159 = vmatpush.xpose.msra.mxu0 0.0
      %160 = vmatpush.xpose.msra.mxu0 0.0
      %161 = vmatpush.xpose.msra.mxu0 0.0
      %162 = vmatpush.xpose.msra.mxu0 0.0
      %163 = vmatpush.xpose.msra.mxu0 0.0
      %164 = vmatpush.xpose.msra.mxu0 0.0
      %165 = vmatpush.xpose.msra.mxu0 0.0
      %166 = vmatpush.xpose.msra.mxu0 0.0
      %167 = vmatpush.xpose.msra.mxu0 0.0
      %168 = vmatpush.xpose.msra.mxu0 %v145
      %169 = vmatmul.f32.gmra.mxu0 %v145
      %v170 = vpop.f32.mrf.mxu0
      %v171 = vadd.f32 0.0, %v170
      %172 = vdwg.mxu0
      %173 = vmatpush.xpose.msra.mxu0 0.0
      %174 = vmatpush.xpose.msra.mxu0 0.0
      %175 = vmatpush.xpose.msra.mxu0 0.0
      %176 = vmatpush.xpose.msra.mxu0 0.0
      %177 = vmatpush.xpose.msra.mxu0 0.0
      %178 = vmatpush.xpose.msra.mxu0 0.0
      %179 = vmatpush.xpose.msra.mxu0 0.0
      %180 = vmatpush.xpose.msra.mxu0 0.0
      %181 = vmatpush.xpose.msra.mxu0 0.0
      %182 = vmatpush.xpose.msra.mxu0 0.0
      %183 = vmatpush.xpose.msra.mxu0 0.0
      %184 = vmatpush.xpose.msra.mxu0 0.0
      %185 = vmatpush.xpose.msra.mxu0 0.0
      %186 = vmatpush.xpose.msra.mxu0 0.0
      %187 = vmatpush.xpose.msra.mxu0 0.0
      %188 = vmatpush.xpose.msra.mxu0 %v146
      %189 = vmatmul.f32.gmra.mxu0 %v146
      %v190 = vpop.f32.mrf.mxu0
      %v191 = vadd.f32 %v171, %v190
      %192 = vdwg.mxu0
      %193 = vmatpush.xpose.msra.mxu0 0.0
      %194 = vmatpush.xpose.msra.mxu0 0.0
      %195 = vmatpush.xpose.msra.mxu0 0.0
      %196 = vmatpush.xpose.msra.mxu0 0.0
      %197 = vmatpush.xpose.msra.mxu0 0.0
      %198 = vmatpush.xpose.msra.mxu0 0.0
      %199 = vmatpush.xpose.msra.mxu0 0.0
      %200 = vmatpush.xpose.msra.mxu0 0.0
      %201 = vmatpush.xpose.msra.mxu0 0.0
      %202 = vmatpush.xpose.msra.mxu0 0.0
      %203 = vmatpush.xpose.msra.mxu0 0.0
      %204 = vmatpush.xpose.msra.mxu0 0.0
      %205 = vmatpush.xpose.msra.mxu0 0.0
      %206 = vmatpush.xpose.msra.mxu0 0.0
      %207 = vmatpush.xpose.msra.mxu0 0.0
      %208 = vmatpush.xpose.msra.mxu0 %v147
      %209 = vmatmul.f32.gmra.mxu0 %v147
      %v210 = vpop.f32.mrf.mxu0
      %v211 = vadd.f32 %v191, %v210
      %212 = vdwg.mxu0
      %213 = vmatpush.xpose.msra.mxu0 0.0
      %214 = vmatpush.xpose.msra.mxu0 0.0
      %215 = vmatpush.xpose.msra.mxu0 0.0
      %216 = vmatpush.xpose.msra.mxu0 0.0
      %217 = vmatpush.xpose.msra.mxu0 0.0
      %218 = vmatpush.xpose.msra.mxu0 0.0
      %219 = vmatpush.xpose.msra.mxu0 0.0
      %220 = vmatpush.xpose.msra.mxu0 0.0
      %221 = vmatpush.xpose.msra.mxu0 0.0
      %222 = vmatpush.xpose.msra.mxu0 0.0
      %223 = vmatpush.xpose.msra.mxu0 0.0
      %224 = vmatpush.xpose.msra.mxu0 0.0
      %225 = vmatpush.xpose.msra.mxu0 0.0
      %226 = vmatpush.xpose.msra.mxu0 0.0
      %227 = vmatpush.xpose.msra.mxu0 0.0
      %228 = vmatpush.xpose.msra.mxu0 %v148
      %229 = vmatmul.f32.gmra.mxu0 %v148
      %v230 = vpop.f32.mrf.mxu0
      %v231 = vadd.f32 %v211, %v230
      %232 = vdwg.mxu0
      %233 = vmatpush.xpose.msra.mxu0 0.0
      %234 = vmatpush.xpose.msra.mxu0 0.0
      %235 = vmatpush.xpose.msra.mxu0 0.0
      %236 = vmatpush.xpose.msra.mxu0 0.0
      %237 = vmatpush.xpose.msra.mxu0 0.0
      %238 = vmatpush.xpose.msra.mxu0 0.0
      %239 = vmatpush.xpose.msra.mxu0 0.0
      %240 = vmatpush.xpose.msra.mxu0 0.0
      %241 = vmatpush.xpose.msra.mxu0 0.0
      %242 = vmatpush.xpose.msra.mxu0 0.0
      %243 = vmatpush.xpose.msra.mxu0 0.0
      %244 = vmatpush.xpose.msra.mxu0 0.0
      %245 = vmatpush.xpose.msra.mxu0 0.0
      %246 = vmatpush.xpose.msra.mxu0 0.0
      %247 = vmatpush.xpose.msra.mxu0 0.0
      %248 = vmatpush.xpose.msra.mxu0 %v149
      %249 = vmatmul.f32.gmra.mxu0 %v149
      %v250 = vpop.f32.mrf.mxu0
      %v251 = vadd.f32 %v231, %v250
      %252 = vdwg.mxu0
      %253 = vmatpush.xpose.msra.mxu0 0.0
      %254 = vmatpush.xpose.msra.mxu0 0.0
      %255 = vmatpush.xpose.msra.mxu0 0.0
      %256 = vmatpush.xpose.msra.mxu0 0.0
      %257 = vmatpush.xpose.msra.mxu0 0.0
      %258 = vmatpush.xpose.msra.mxu0 0.0
      %259 = vmatpush.xpose.msra.mxu0 0.0
      %260 = vmatpush.xpose.msra.mxu0 0.0
      %261 = vmatpush.xpose.msra.mxu0 0.0
      %262 = vmatpush.xpose.msra.mxu0 0.0
      %263 = vmatpush.xpose.msra.mxu0 0.0
      %264 = vmatpush.xpose.msra.mxu0 0.0
      %265 = vmatpush.xpose.msra.mxu0 0.0
      %266 = vmatpush.xpose.msra.mxu0 0.0
      %267 = vmatpush.xpose.msra.mxu0 0.0
      %268 = vmatpush.xpose.msra.mxu0 %v150
      %269 = vmatmul.f32.gmra.mxu0 %v150
      %v270 = vpop.f32.mrf.mxu0
      %v271 = vadd.f32 %v251, %v270
      %272 = vdwg.mxu0
      %273 = vmatpush.xpose.msra.mxu0 0.0
      %274 = vmatpush.xpose.msra.mxu0 0.0
      %275 = vmatpush.xpose.msra.mxu0 0.0
      %276 = vmatpush.xpose.msra.mxu0 0.0
      %277 = vmatpush.xpose.msra.mxu0 0.0
      %278 = vmatpush.xpose.msra.mxu0 0.0
      %279 = vmatpush.xpose.msra.mxu0 0.0
      %280 = vmatpush.xpose.msra.mxu0 0.0
      %281 = vmatpush.xpose.msra.mxu0 0.0
      %282 = vmatpush.xpose.msra.mxu0 0.0
      %283 = vmatpush.xpose.msra.mxu0 0.0
      %284 = vmatpush.xpose.msra.mxu0 0.0
      %285 = vmatpush.xpose.msra.mxu0 0.0
      %286 = vmatpush.xpose.msra.mxu0 0.0
      %287 = vmatpush.xpose.msra.mxu0 0.0
      %288 = vmatpush.xpose.msra.mxu0 %v151
      %289 = vmatmul.f32.gmra.mxu0 %v151
      %v290 = vpop.f32.mrf.mxu0
      %v291 = vadd.f32 %v271, %v290
      %292 = vdwg.mxu0
      %293 = vmatpush.xpose.msra.mxu0 0.0
      %294 = vmatpush.xpose.msra.mxu0 0.0
      %295 = vmatpush.xpose.msra.mxu0 0.0
      %296 = vmatpush.xpose.msra.mxu0 0.0
      %297 = vmatpush.xpose.msra.mxu0 0.0
      %298 = vmatpush.xpose.msra.mxu0 0.0
      %299 = vmatpush.xpose.msra.mxu0 0.0
      %300 = vmatpush.xpose.msra.mxu0 0.0
      %301 = vmatpush.xpose.msra.mxu0 0.0
      %302 = vmatpush.xpose.msra.mxu0 0.0
      %303 = vmatpush.xpose.msra.mxu0 0.0
      %304 = vmatpush.xpose.msra.mxu0 0.0
      %305 = vmatpush.xpose.msra.mxu0 0.0
      %306 = vmatpush.xpose.msra.mxu0 0.0
      %307 = vmatpush.xpose.msra.mxu0 0.0
      %308 = vmatpush.xpose.msra.mxu0 %v152
      %309 = vmatmul.f32.gmra.mxu0 %v152
      %v310 = vpop.f32.mrf.mxu0
      %v311 = vadd.f32 %v291, %v310
      %312 = vdwg.mxu0
      %vm313 = vcmask 64512
      %v314 = vsel %vm313, %v311, inf
      %315 = vmin.xlane.f32.xlu0 %v314
      %v316 = vpop.xlane.xlu0 %315
      %v317 = vsub.f32 %v316, %v311
      %v318 = vmul.f32 %v317, 1.442695
      %v319 = vpow.pop %v318
      %v320 = vsel %vm313, %v319, 0.0
      %321 = vadd.xlane.f32.xlu0 %v320
      %v322 = vpop.xlane.xlu0 %321
      %v323 = vrcp.pop %v322
      %v324 = vmul.f32 %v319, %v323
      %v326 = vsel %vm313, %v324, 0
      %328 = vmatpush.msra.mxu0 0.0
      %329 = vmatpush.msra.mxu0 0.0
      %330 = vmatpush.msra.mxu0 0.0
      %331 = vmatpush.msra.mxu0 0.0
      %332 = vmatpush.msra.mxu0 0.0
      %333 = vmatpush.msra.mxu0 0.0
      %334 = vmatpush.msra.mxu0 0.0
      %335 = vmatpush.msra.mxu0 0.0
      %336 = vmatpush.msra.mxu0 0.0
      %337 = vmatpush.msra.mxu0 0.0
      %338 = vmatpush.msra.mxu0 0.0
      %339 = vmatpush.msra.mxu0 0.0
      %340 = vmatpush.msra.mxu0 0.0
      %341 = vmatpush.msra.mxu0 0.0
      %342 = vmatpush.msra.mxu0 0.0
      %343 = vmatpush.msra.mxu0 %v145
      %344 = vmatmul.f32.gmra.mxu0 %v326
      %v345 = vpop.f32.mrf.mxu0
      %v346 = vadd.f32 0.0, %v345
      %347 = vdwg.mxu0
      %348 = vmatpush.msra.mxu0 0.0
      %349 = vmatpush.msra.mxu0 0.0
      %350 = vmatpush.msra.mxu0 0.0
      %351 = vmatpush.msra.mxu0 0.0
      %352 = vmatpush.msra.mxu0 0.0
      %353 = vmatpush.msra.mxu0 0.0
      %354 = vmatpush.msra.mxu0 0.0
      %355 = vmatpush.msra.mxu0 0.0
      %356 = vmatpush.msra.mxu0 0.0
      %357 = vmatpush.msra.mxu0 0.0
      %358 = vmatpush.msra.mxu0 0.0
      %359 = vmatpush.msra.mxu0 0.0
      %360 = vmatpush.msra.mxu0 0.0
      %361 = vmatpush.msra.mxu0 0.0
      %362 = vmatpush.msra.mxu0 0.0
      %363 = vmatpush.msra.mxu0 %v146
      %364 = vmatmul.f32.gmra.mxu0 %v326
      %v365 = vpop.f32.mrf.mxu0
      %v366 = vadd.f32 0.0, %v365
      %367 = vdwg.mxu0
      %368 = vmatpush.msra.mxu0 0.0
      %369 = vmatpush.msra.mxu0 0.0
      %370 = vmatpush.msra.mxu0 0.0
      %371 = vmatpush.msra.mxu0 0.0
      %372 = vmatpush.msra.mxu0 0.0
      %373 = vmatpush.msra.mxu0 0.0
      %374 = vmatpush.msra.mxu0 0.0
      %375 = vmatpush.msra.mxu0 0.0
      %376 = vmatpush.msra.mxu0 0.0
      %377 = vmatpush.msra.mxu0 0.0
      %378 = vmatpush.msra.mxu0 0.0
      %379 = vmatpush.msra.mxu0 0.0
      %380 = vmatpush.msra.mxu0 0.0
      %381 = vmatpush.msra.mxu0 0.0
      %382 = vmatpush.msra.mxu0 0.0
      %383 = vmatpush.msra.mxu0 %v147
      %384 = vmatmul.f32.gmra.mxu0 %v326
      %v385 = vpop.f32.mrf.mxu0
      %v386 = vadd.f32 0.0, %v385
      %387 = vdwg.mxu0
      %388 = vmatpush.msra.mxu0 0.0
      %389 = vmatpush.msra.mxu0 0.0
      %390 = vmatpush.msra.mxu0 0.0
      %391 = vmatpush.msra.mxu0 0.0
      %392 = vmatpush.msra.mxu0 0.0
      %393 = vmatpush.msra.mxu0 0.0
      %394 = vmatpush.msra.mxu0 0.0
      %395 = vmatpush.msra.mxu0 0.0
      %396 = vmatpush.msra.mxu0 0.0
      %397 = vmatpush.msra.mxu0 0.0
      %398 = vmatpush.msra.mxu0 0.0
      %399 = vmatpush.msra.mxu0 0.0
      %400 = vmatpush.msra.mxu0 0.0
      %401 = vmatpush.msra.mxu0 0.0
      %402 = vmatpush.msra.mxu0 0.0
      %403 = vmatpush.msra.mxu0 %v148
      %404 = vmatmul.f32.gmra.mxu0 %v326
      %v405 = vpop.f32.mrf.mxu0
      %v406 = vadd.f32 0.0, %v405
      %407 = vdwg.mxu0
      %408 = vmatpush.msra.mxu0 0.0
      %409 = vmatpush.msra.mxu0 0.0
      %410 = vmatpush.msra.mxu0 0.0
      %411 = vmatpush.msra.mxu0 0.0
      %412 = vmatpush.msra.mxu0 0.0
      %413 = vmatpush.msra.mxu0 0.0
      %414 = vmatpush.msra.mxu0 0.0
      %415 = vmatpush.msra.mxu0 0.0
      %416 = vmatpush.msra.mxu0 0.0
      %417 = vmatpush.msra.mxu0 0.0
      %418 = vmatpush.msra.mxu0 0.0
      %419 = vmatpush.msra.mxu0 0.0
      %420 = vmatpush.msra.mxu0 0.0
      %421 = vmatpush.msra.mxu0 0.0
      %422 = vmatpush.msra.mxu0 0.0
      %423 = vmatpush.msra.mxu0 %v149
      %424 = vmatmul.f32.gmra.mxu0 %v326
      %v425 = vpop.f32.mrf.mxu0
      %v426 = vadd.f32 0.0, %v425
      %427 = vdwg.mxu0
      %428 = vmatpush.msra.mxu0 0.0
      %429 = vmatpush.msra.mxu0 0.0
      %430 = vmatpush.msra.mxu0 0.0
      %431 = vmatpush.msra.mxu0 0.0
      %432 = vmatpush.msra.mxu0 0.0
      %433 = vmatpush.msra.mxu0 0.0
      %434 = vmatpush.msra.mxu0 0.0
      %435 = vmatpush.msra.mxu0 0.0
      %436 = vmatpush.msra.mxu0 0.0
      %437 = vmatpush.msra.mxu0 0.0
      %438 = vmatpush.msra.mxu0 0.0
      %439 = vmatpush.msra.mxu0 0.0
      %440 = vmatpush.msra.mxu0 0.0
      %441 = vmatpush.msra.mxu0 0.0
      %442 = vmatpush.msra.mxu0 0.0
      %443 = vmatpush.msra.mxu0 %v150
      %444 = vmatmul.f32.gmra.mxu0 %v326
      %v445 = vpop.f32.mrf.mxu0
      %v446 = vadd.f32 0.0, %v445
      %447 = vdwg.mxu0
      %448 = vmatpush.msra.mxu0 0.0
      %449 = vmatpush.msra.mxu0 0.0
      %450 = vmatpush.msra.mxu0 0.0
      %451 = vmatpush.msra.mxu0 0.0
      %452 = vmatpush.msra.mxu0 0.0
      %453 = vmatpush.msra.mxu0 0.0
      %454 = vmatpush.msra.mxu0 0.0
      %455 = vmatpush.msra.mxu0 0.0
      %456 = vmatpush.msra.mxu0 0.0
      %457 = vmatpush.msra.mxu0 0.0
      %458 = vmatpush.msra.mxu0 0.0
      %459 = vmatpush.msra.mxu0 0.0
      %460 = vmatpush.msra.mxu0 0.0
      %461 = vmatpush.msra.mxu0 0.0
      %462 = vmatpush.msra.mxu0 0.0
      %463 = vmatpush.msra.mxu0 %v151
      %464 = vmatmul.f32.gmra.mxu0 %v326
      %v465 = vpop.f32.mrf.mxu0
      %v466 = vadd.f32 0.0, %v465
      %467 = vdwg.mxu0
      %468 = vmatpush.msra.mxu0 0.0
      %469 = vmatpush.msra.mxu0 0.0
      %470 = vmatpush.msra.mxu0 0.0
      %471 = vmatpush.msra.mxu0 0.0
      %472 = vmatpush.msra.mxu0 0.0
      %473 = vmatpush.msra.mxu0 0.0
      %474 = vmatpush.msra.mxu0 0.0
      %475 = vmatpush.msra.mxu0 0.0
      %476 = vmatpush.msra.mxu0 0.0
      %477 = vmatpush.msra.mxu0 0.0
      %478 = vmatpush.msra.mxu0 0.0
      %479 = vmatpush.msra.mxu0 0.0
      %480 = vmatpush.msra.mxu0 0.0
      %481 = vmatpush.msra.mxu0 0.0
      %482 = vmatpush.msra.mxu0 0.0
      %483 = vmatpush.msra.mxu0 %v152
      %484 = vmatmul.f32.gmra.mxu0 %v326
      %v485 = vpop.f32.mrf.mxu0
      %v486 = vadd.f32 0.0, %v485
      %487 = vdwg.mxu0
      %s488 = sld [smem:[#allocation2]]
      %v489 = vstv %s488
      %v490 = vmul.f32 %v489, %v346
      %v491 = vmul.f32 %v489, %v366
      %v492 = vmul.f32 %v489, %v386
      %v493 = vmul.f32 %v489, %v406
      %v494 = vmul.f32 %v489, %v426
      %v495 = vmul.f32 %v489, %v446
      %v496 = vmul.f32 %v489, %v466
      %v497 = vmul.f32 %v489, %v486
      %v498 = vadd.f32 %v490, %v145
      %v499 = vadd.f32 %v491, %v146
      %v500 = vadd.f32 %v492, %v147
      %v501 = vadd.f32 %v493, %v148
      %v502 = vadd.f32 %v494, %v149
      %v503 = vadd.f32 %v495, %v150
      %v504 = vadd.f32 %v496, %v151
      %v505 = vadd.f32 %v497, %v152
      %506 = vst [vmem:[%s144] sm:$0xff] %v498
      %507 = vst [vmem:[%s144 + $0x8] sm:$0xff] %v499
      %508 = vst [vmem:[%s144 + $0x10] sm:$0xff] %v500
      %509 = vst [vmem:[%s144 + $0x18] sm:$0xff] %v501
      %510 = vst [vmem:[%s144 + $0x20] sm:$0xff] %v502
      %511 = vst [vmem:[%s144 + $0x28] sm:$0xff] %v503
      %512 = vst [vmem:[%s144 + $0x30] sm:$0xff] %v504
      %513 = vst [vmem:[%s144 + $0x38] sm:$0xff] %v505
      %p514 = scmp.lt.s32.totalorder %s14, 1
      %s515 = scalar_select %p514, %s14, 1
      %s516 = smul.addr %s515, 8
      %s517 = smul.addr %s516, 8
      %s518 = scalar_lea.vmem %s2, %s517
      // Predicated region
      $region29: #{lam_module.1} parent=27 // pred_check
        %p519 = pneg %p79
      $region30: #{lam_module.1} parent=27 // pred_check_branch
        %521 = sbr.rel (%p519) target = $region32
      $region31: #{lam_module.1} parent=27 // pred_region
        _
      $region32: #{lam_module.1} parent=27 // pred_fallthru
        _
    $region28: #{lam_module.1} parent=5 // pred_fallthru
      _
    %p522 = scmp.le.s32.totalorder 2, %s9
    // Predicated region
    $region33: #{lam_module.1} parent=5 // pred_check
      %p523 = pneg %p522
    $region34: #{lam_module.1} parent=5 // pred_check_branch
      %525 = sbr.rel (%p523) target = $region36
    $region35: #{lam_module.1} parent=5 // pred_region
      %s526 = ssub.s32 %s9, 2
      // Predicated region
      $region37: #{lam_module.1} parent=35 // pred_check
        %p527 = pneg %p85
      $region38: #{lam_module.1} parent=35 // pred_check_branch
        %529 = sbr.rel (%p527) target = $region40
      $region39: #{lam_module.1} parent=35 // pred_region
        %p530 = scmp.lt.s32.totalorder %s15, 1
        %s531 = scalar_select %p530, %s15, 1
        %s532 = smul.addr %s531, 8
        %s533 = smul.addr %s532, 8
        %s534 = scalar_lea.vmem %s2, %s533
      $region40: #{lam_module.1} parent=35 // pred_fallthru
        _
    $region36: #{lam_module.1} parent=5 // pred_fallthru
      _
  $region6: #{lam_module.1} parent=0 // loop_footer
    %s13 = sadd.s32 1, %s9
  $region7: #{lam_module.1} parent=0 // loop_footer_branch
    %8 = sbr.rel target = $region3
  $region8: #{lam_module.1} parent=0 // loop_exit
    _

</llo_original>
